<compile_context>
chip_gen: v6e
topology: v6e:2x2x1
jax: 0.10.0
libtpu: 0.0.40
codegen_flags: <defaults>
</compile_context>

<pallas_src>
import jax
import jax.numpy as jnp
from jax.experimental import pallas as pl
from jax.experimental.pallas import tpu as pltpu


def edge_decoder_kernel(zs_ref, zd_ref, w1a_ref, w1b_ref, b1_ref, w2_ref,
                        b2_ref, o_ref):
    # fc1: cat([zs, zd], dim=1) @ W1 + b1, split across the two halves of W1.
    # MXU matmuls with f32 accumulation (inputs may be bf16).
    h = jnp.dot(zs_ref[...], w1a_ref[...], preferred_element_type=jnp.float32)
    h = h + jnp.dot(zd_ref[...], w1b_ref[...], preferred_element_type=jnp.float32)
    h = jnp.maximum(h + b1_ref[...], 0.0)                 # bias + ReLU in f32 (VPU)

    # fc2: (TILE_E, H) @ (H, 1) done as VPU multiply + XLU lane reduction; the
    # score vector is stored lane-dense into a (1, TILE_E) output block.
    score = jnp.sum(h * w2_ref[...], axis=-1) + b2_ref[0]  # (TILE_E,)
    o_ref[0, :] = score.astype(o_ref.dtype)


def _round_up(x, m):
    return ((x + m - 1) // m) * m


def edge_decoder(z, edge_index, w1, b1, w2, b2, *, block_e=1024,
                 compute_dtype=jnp.float32):
    """z: [N,H]; edge_index: [2,E] int32; w1: [2H,H]; b1: [H]; w2: [H,1]; b2: [1].
    Returns [E] f32 scores (matches PyTorch .view(-1))."""
    N, H = z.shape
    E = edge_index.shape[1]

    # Glue: data-dependent row gather of endpoint embeddings (XLA gather).
    # TODO(synk): when N*H*bytes fits VMEM, gather in-kernel from a resident z
    # via scalar-prefetched edge indices to cut the extra HBM round-trip (~3x
    # traffic) of materializing z_src/z_dst.
    z_c = z.astype(compute_dtype)
    z_src = z_c[edge_index[0]]        # [E, H]
    z_dst = z_c[edge_index[1]]        # [E, H]

    # Lane-dense edge tile: multiple of 128 (so also of 8); sized well inside
    # the default scoped VMEM on all of v5e/v6e/v7x for H up to a few hundred.
    tile_e = max(128, min(int(block_e), _round_up(E, 128)))
    tile_e = _round_up(tile_e, 128)
    e_pad = _round_up(E, tile_e)
    if e_pad != E:
        z_src = jnp.pad(z_src, ((0, e_pad - E), (0, 0)))
        z_dst = jnp.pad(z_dst, ((0, e_pad - E), (0, 0)))
    n_tiles = e_pad // tile_e

    w1a = w1[:H, :].astype(compute_dtype)          # source half of fc1 weight
    w1b = w1[H:, :].astype(compute_dtype)          # dest half of fc1 weight
    b1_row = b1.reshape(1, H).astype(jnp.float32)
    w2_row = w2.reshape(1, H).astype(jnp.float32)  # (H,1) -> (1,H) row
    b2_s = b2.reshape(1).astype(jnp.float32)

    out = pl.pallas_call(
        edge_decoder_kernel,
        out_shape=jax.ShapeDtypeStruct((n_tiles, tile_e), jnp.float32),
        grid=(n_tiles,),
        in_specs=[
            pl.BlockSpec((tile_e, H), lambda i: (i, 0)),   # z_src tile (streamed)
            pl.BlockSpec((tile_e, H), lambda i: (i, 0)),   # z_dst tile (streamed)
            pl.BlockSpec((H, H), lambda i: (0, 0)),        # W1[:H]  (resident)
            pl.BlockSpec((H, H), lambda i: (0, 0)),        # W1[H:]  (resident)
            pl.BlockSpec((1, H), lambda i: (0, 0)),        # b1 row  (resident)
            pl.BlockSpec((1, H), lambda i: (0, 0)),        # w2 row  (resident)
            pl.BlockSpec(memory_space=pltpu.MemorySpace.SMEM),  # b2 scalar
        ],
        out_specs=pl.BlockSpec((1, tile_e), lambda i: (i, 0)),
        compiler_params=pltpu.CompilerParams(
            dimension_semantics=("parallel",)),
    )(z_src, z_dst, w1a, w1b, b1_row, w2_row, b2_s)

    return out.reshape(-1)[:E]


if __name__ == "__main__":
    key = jax.random.PRNGKey(0)
    N, H, E = 16, 32, 8           # small shapes: 16 nodes, hidden=32, 8 edges

    k_z, k_w1, k_b1, k_w2, k_b2, k_e = jax.random.split(key, 6)
    z = jax.random.normal(k_z, (N, H), dtype=jnp.float32)
    # Deterministic parameter init (synthetic; not a checkpoint load).
    w1 = jax.random.normal(k_w1, (2 * H, H), dtype=jnp.float32) * 0.1
    b1 = jax.random.normal(k_b1, (H,), dtype=jnp.float32) * 0.1
    w2 = jax.random.normal(k_w2, (H, 1), dtype=jnp.float32) * 0.1
    b2 = jax.random.normal(k_b2, (1,), dtype=jnp.float32) * 0.1
    edge_index = jax.random.randint(k_e, (2, E), 0, N, dtype=jnp.int32)

    # Pure-JAX reference (same math as the PyTorch forward).
    edge_emb = jnp.concatenate([z[edge_index[0]], z[edge_index[1]]], axis=1)
    ref = (jnp.maximum(edge_emb @ w1 + b1, 0.0) @ w2 + b2).reshape(-1)

    # f32 path: tight check.
    out = jax.block_until_ready(edge_decoder(z, edge_index, w1, b1, w2, b2))
    assert out.shape == (E,)
    assert jnp.allclose(out, ref, atol=1e-5, rtol=1e-5)

    # bf16 activation/weight path (halves HBM traffic on v6e/v7x): loose check.
    out_bf16 = jax.block_until_ready(
        edge_decoder(z, edge_index, w1, b1, w2, b2, compute_dtype=jnp.bfloat16))
    assert jnp.allclose(out_bf16, ref, atol=5e-2, rtol=5e-2)

    print("KERNEL_OK")
</pallas_src>

<mosaic_0001>
module attributes {stable_mosaic.version = 11 : i64} {
  func.func @edge_decoder_kernel(%arg0: i32, %arg1: memref<128x32xf32, #tpu.memory_space<vmem>>, %arg2: memref<128x32xf32, #tpu.memory_space<vmem>>, %arg3: memref<32x32xf32, #tpu.memory_space<vmem>>, %arg4: memref<32x32xf32, #tpu.memory_space<vmem>>, %arg5: memref<1x32xf32, #tpu.memory_space<vmem>>, %arg6: memref<1x32xf32, #tpu.memory_space<vmem>>, %arg7: memref<1xf32, #tpu.memory_space<smem>>, %arg8: memref<1x128xf32, #tpu.memory_space<vmem>>) attributes {dimension_semantics = [#tpu.dimension_semantics<parallel>], iteration_bounds = array<i64: 1>, scalar_prefetch = 0 : i64, scratch_operands = 0 : i64, tpu.core_type = #tpu.core_type<tc>, window_params = [{transform_indices = @transform_0, window_bounds = array<i64: 128, 32>}, {transform_indices = @transform_1, window_bounds = array<i64: 128, 32>}, {pipeline_mode = #tpu.pipeline_mode<synchronous>, transform_indices = @transform_2, window_bounds = array<i64: 32, 32>}, {pipeline_mode = #tpu.pipeline_mode<synchronous>, transform_indices = @transform_3, window_bounds = array<i64: 32, 32>}, {pipeline_mode = #tpu.pipeline_mode<synchronous>, transform_indices = @transform_4, window_bounds = array<i64: 1, 32>}, {pipeline_mode = #tpu.pipeline_mode<synchronous>, transform_indices = @transform_5, window_bounds = array<i64: 1, 32>}, {transform_indices = @transform_6, window_bounds = array<i64: 1>}, {transform_indices = @transform_7, window_bounds = array<i64: 1, 128>}]} {
    %c0 = arith.constant 0 : index
    %c0_0 = arith.constant 0 : index
    %0 = vector.load %arg1[%c0, %c0_0] : memref<128x32xf32, #tpu.memory_space<vmem>>, vector<128x32xf32>
    %c0_1 = arith.constant 0 : index
    %c0_2 = arith.constant 0 : index
    %1 = vector.load %arg3[%c0_1, %c0_2] : memref<32x32xf32, #tpu.memory_space<vmem>>, vector<32x32xf32>
    %cst = arith.constant dense<0.000000e+00> : vector<128x32xf32>
    %2 = tpu.matmul %0, %1, %cst {dimension_numbers = #tpu.dot_dimension_numbers<[1], [0], [0], [1], [0, 0, 1, 1], [], []>} : vector<128x32xf32>, vector<32x32xf32>, vector<128x32xf32> -> vector<128x32xf32>
    %c0_3 = arith.constant 0 : index
    %c0_4 = arith.constant 0 : index
    %3 = vector.load %arg2[%c0_3, %c0_4] : memref<128x32xf32, #tpu.memory_space<vmem>>, vector<128x32xf32>
    %c0_5 = arith.constant 0 : index
    %c0_6 = arith.constant 0 : index
    %4 = vector.load %arg4[%c0_5, %c0_6] : memref<32x32xf32, #tpu.memory_space<vmem>>, vector<32x32xf32>
    %cst_7 = arith.constant dense<0.000000e+00> : vector<128x32xf32>
    %5 = tpu.matmul %3, %4, %cst_7 {dimension_numbers = #tpu.dot_dimension_numbers<[1], [0], [0], [1], [0, 0, 1, 1], [], []>} : vector<128x32xf32>, vector<32x32xf32>, vector<128x32xf32> -> vector<128x32xf32>
    %6 = arith.addf %2, %5 : vector<128x32xf32>
    %c0_8 = arith.constant 0 : index
    %c0_9 = arith.constant 0 : index
    %7 = vector.load %arg5[%c0_8, %c0_9] : memref<1x32xf32, #tpu.memory_space<vmem>>, vector<1x32xf32>
    %8 = vector.broadcast %7 : vector<1x32xf32> to vector<128x32xf32>
    %9 = arith.addf %6, %8 : vector<128x32xf32>
    %cst_10 = arith.constant 0.000000e+00 : f32
    %10 = vector.broadcast %cst_10 : f32 to vector<128x32xf32>
    %11 = arith.maximumf %9, %10 : vector<128x32xf32>
    %c0_11 = arith.constant 0 : index
    %c0_12 = arith.constant 0 : index
    %12 = vector.load %arg6[%c0_11, %c0_12] : memref<1x32xf32, #tpu.memory_space<vmem>>, vector<1x32xf32>
    %13 = vector.broadcast %12 : vector<1x32xf32> to vector<128x32xf32>
    %14 = arith.mulf %11, %13 : vector<128x32xf32>
    %cst_13 = arith.constant dense<0.000000e+00> : vector<128xf32>
    %15 = vector.multi_reduction <add>, %14, %cst_13 [1] : vector<128x32xf32> to vector<128xf32>
    %c0_14 = arith.constant 0 : index
    %16 = memref.load %arg7[%c0_14] : memref<1xf32, #tpu.memory_space<smem>>
    %17 = vector.broadcast %16 : f32 to vector<128xf32>
    %18 = arith.addf %15, %17 : vector<128xf32>
    %c0_15 = arith.constant 0 : index
    %c0_16 = arith.constant 0 : index
    %19 = vector.load %arg8[%c0_15, %c0_16] : memref<1x128xf32, #tpu.memory_space<vmem>>, vector<1x128xf32>
    %20 = vector.shape_cast %19 : vector<1x128xf32> to vector<128xf32>
    %21 = vector.shape_cast %18 : vector<128xf32> to vector<1x128xf32>
    tpu.vector_store %arg8[%c0_15, %c0_16], %21 {strides = array<i32>} : memref<1x128xf32, #tpu.memory_space<vmem>>, vector<1x128xf32>,
    return
  }
  func.func @transform_0(%arg0: i32) -> (i32, i32) {
    %c0_i32 = arith.constant 0 : i32
    %c0_i32_0 = arith.constant 0 : i32
    return %arg0, %c0_i32 : i32, i32
  }
  func.func @transform_1(%arg0: i32) -> (i32, i32) {
    %c0_i32 = arith.constant 0 : i32
    %c0_i32_0 = arith.constant 0 : i32
    return %arg0, %c0_i32 : i32, i32
  }
  func.func @transform_2(%arg0: i32) -> (i32, i32) {
    %c0_i32 = arith.constant 0 : i32
    %c0_i32_0 = arith.constant 0 : i32
    %c0_i32_1 = arith.constant 0 : i32
    return %c0_i32, %c0_i32_0 : i32, i32
  }
  func.func @transform_3(%arg0: i32) -> (i32, i32) {
    %c0_i32 = arith.constant 0 : i32
    %c0_i32_0 = arith.constant 0 : i32
    %c0_i32_1 = arith.constant 0 : i32
    return %c0_i32, %c0_i32_0 : i32, i32
  }
  func.func @transform_4(%arg0: i32) -> (i32, i32) {
    %c0_i32 = arith.constant 0 : i32
    %c0_i32_0 = arith.constant 0 : i32
    %c0_i32_1 = arith.constant 0 : i32
    return %c0_i32, %c0_i32_0 : i32, i32
  }
  func.func @transform_5(%arg0: i32) -> (i32, i32) {
    %c0_i32 = arith.constant 0 : i32
    %c0_i32_0 = arith.constant 0 : i32
    %c0_i32_1 = arith.constant 0 : i32
    return %c0_i32, %c0_i32_0 : i32, i32
  }
  func.func @transform_6(%arg0: i32) -> i32 {
    %c0_i32 = arith.constant 0 : i32
    %c0_i32_0 = arith.constant 0 : i32
    return %c0_i32 : i32
  }
  func.func @transform_7(%arg0: i32) -> (i32, i32) {
    %c0_i32 = arith.constant 0 : i32
    %c0_i32_0 = arith.constant 0 : i32
    return %arg0, %c0_i32 : i32, i32
  }
}

</mosaic_0001>

<llo_original>
// kernel: tpu_custom_call.1
$region0: #{tpu_custom_call.1}
  #allocation0 [shape = 'u32[]', space=smem, size = 0x4, offset = 0x4, fixed_abs, tag = 'smem constant byte address 0x4 - core index']
  #allocation1 [shape = 'u32[144,128]{1,0:T(1,128)}', space=vmem, size = 0x12000, scoped, tag = 'internal scratch']
  #allocation2 [shape = 'f32[1]{0:T(128)S(6)}', space=smem, size = 0x200, scoped, tag = 'scoped memory for tpu_custom_call.1']
  %s0 = inlined_call_operand.vmem [shape: f32[128,32], index: 0, kind: input, shape index: {}]
  %s1 = inlined_call_operand.vmem [shape: f32[128,32], index: 1, kind: input, shape index: {}]
  %s2 = inlined_call_operand.vmem [shape: f32[32,32], index: 2, kind: input, shape index: {}]
  %s3 = inlined_call_operand.vmem [shape: f32[32,32], index: 3, kind: input, shape index: {}]
  %s4 = inlined_call_operand.vmem [shape: f32[1,32], index: 4, kind: input, shape index: {}]
  %s5 = inlined_call_operand.vmem [shape: f32[1,32], index: 5, kind: input, shape index: {}]
  %s6 = inlined_call_operand.<no memory space> [shape: f32[1], index: 6, kind: input, shape index: {}]
  %s7 = inlined_call_operand.hbm [shape: f32[1,128], index: 7, kind: output, shape index: {}]
  %s8 = sld [smem:[#allocation0]]
  $region38: #{tpu_custom_call.1} parent=0
    _
  %s10 = ssub.s32 1, %s8
  %s11 = scalar_select 0, %s10, %s8
  %12 = sst [smem:[#allocation2]] %s6
  $region1: #{tpu_custom_call.1} parent=0
    #allocation3 [shape = 'u8[512]{0}', space=vmem, size = 0x400, scoped, tag = 'output window, operand 0, single buffered']
    #allocation4 [shape = 's32[1]{0}', space=sflag, size = 0x4, scoped, tag = 'scoped memory for tpu_custom_call.1']
    %13 = vsyncpa [#allocation4], 0
    // Predicated region
    $region2: #{tpu_custom_call.1} parent=1 // pred_check
      _
    $region3: #{tpu_custom_call.1} parent=1 // pred_check_branch
      %15 = sbr.rel (0) target = $region5
    $region4: #{tpu_custom_call.1} parent=1 // pred_region
      _
    $region5: #{tpu_custom_call.1} parent=1 // pred_fallthru
      _
    // Predicated region
    $region6: #{tpu_custom_call.1} parent=1 // pred_check
      _
    $region7: #{tpu_custom_call.1} parent=1 // pred_check_branch
      %17 = sbr.rel (0) target = $region9
    $region8: #{tpu_custom_call.1} parent=1 // pred_region
      _
    $region9: #{tpu_custom_call.1} parent=1 // pred_fallthru
      _
    // Predicated region
    $region10: #{tpu_custom_call.1} parent=1 // pred_check
      _
    $region11: #{tpu_custom_call.1} parent=1 // pred_check_branch
      %19 = sbr.rel (0) target = $region13
    $region12: #{tpu_custom_call.1} parent=1 // pred_region
      _
    $region13: #{tpu_custom_call.1} parent=1 // pred_fallthru
      _
    // Predicated region
    $region14: #{tpu_custom_call.1} parent=1 // pred_check
      _
    $region15: #{tpu_custom_call.1} parent=1 // pred_check_branch
      %21 = sbr.rel (0) target = $region17
    $region16: #{tpu_custom_call.1} parent=1 // pred_region
      _
    $region17: #{tpu_custom_call.1} parent=1 // pred_fallthru
      _
    // Predicated region
    $region18: #{tpu_custom_call.1} parent=1 // pred_check
      _
    $region19: #{tpu_custom_call.1} parent=1 // pred_check_branch
      %23 = sbr.rel (0) target = $region21
    $region20: #{tpu_custom_call.1} parent=1 // pred_region
      _
    $region21: #{tpu_custom_call.1} parent=1 // pred_fallthru
      _
    // Predicated region
    $region22: #{tpu_custom_call.1} parent=1 // pred_check
      _
    $region23: #{tpu_custom_call.1} parent=1 // pred_check_branch
      %25 = sbr.rel (0) target = $region25
    $region24: #{tpu_custom_call.1} parent=1 // pred_region
      _
    $region25: #{tpu_custom_call.1} parent=1 // pred_fallthru
      _
    // Predicated region
    $region26: #{tpu_custom_call.1} parent=1 // pred_check
      _
    $region27: #{tpu_custom_call.1} parent=1 // pred_check_branch
      %27 = sbr.rel (0) target = $region29
    $region28: #{tpu_custom_call.1} parent=1 // pred_region
      _
    $region29: #{tpu_custom_call.1} parent=1 // pred_fallthru
      _
    %v28 = vld [vmem:[%s0] sm:$0xff]
    %v29 = vld [vmem:[%s0 + $0x8] sm:$0xff]
    %v30 = vld [vmem:[%s0 + $0x10] sm:$0xff]
    %v31 = vld [vmem:[%s0 + $0x18] sm:$0xff]
    %v32 = vld [vmem:[%s0 + $0x20] sm:$0xff]
    %v33 = vld [vmem:[%s0 + $0x28] sm:$0xff]
    %v34 = vld [vmem:[%s0 + $0x30] sm:$0xff]
    %v35 = vld [vmem:[%s0 + $0x38] sm:$0xff]
    %v36 = vld [vmem:[%s0 + $0x40] sm:$0xff]
    %v37 = vld [vmem:[%s0 + $0x48] sm:$0xff]
    %v38 = vld [vmem:[%s0 + $0x50] sm:$0xff]
    %v39 = vld [vmem:[%s0 + $0x58] sm:$0xff]
    %v40 = vld [vmem:[%s0 + $0x60] sm:$0xff]
    %v41 = vld [vmem:[%s0 + $0x68] sm:$0xff]
    %v42 = vld [vmem:[%s0 + $0x70] sm:$0xff]
    %v43 = vld [vmem:[%s0 + $0x78] sm:$0xff]
    %v44 = vld [vmem:[%s2] sm:$0xff]
    %v45 = vld [vmem:[%s2 + $0x8] sm:$0xff]
    %v46 = vld [vmem:[%s2 + $0x10] sm:$0xff]
    %v47 = vld [vmem:[%s2 + $0x18] sm:$0xff]
    %v48 = vld [vmem:[%s1] sm:$0xff]
    %v49 = vld [vmem:[%s1 + $0x8] sm:$0xff]
    %v50 = vld [vmem:[%s1 + $0x10] sm:$0xff]
    %v51 = vld [vmem:[%s1 + $0x18] sm:$0xff]
    %v52 = vld [vmem:[%s1 + $0x20] sm:$0xff]
    %v53 = vld [vmem:[%s1 + $0x28] sm:$0xff]
    %v54 = vld [vmem:[%s1 + $0x30] sm:$0xff]
    %v55 = vld [vmem:[%s1 + $0x38] sm:$0xff]
    %v56 = vld [vmem:[%s1 + $0x40] sm:$0xff]
    %v57 = vld [vmem:[%s1 + $0x48] sm:$0xff]
    %v58 = vld [vmem:[%s1 + $0x50] sm:$0xff]
    %v59 = vld [vmem:[%s1 + $0x58] sm:$0xff]
    %v60 = vld [vmem:[%s1 + $0x60] sm:$0xff]
    %v61 = vld [vmem:[%s1 + $0x68] sm:$0xff]
    %v62 = vld [vmem:[%s1 + $0x70] sm:$0xff]
    %v63 = vld [vmem:[%s1 + $0x78] sm:$0xff]
    %v64 = vld [vmem:[%s3] sm:$0xff]
    %v65 = vld [vmem:[%s3 + $0x8] sm:$0xff]
    %v66 = vld [vmem:[%s3 + $0x10] sm:$0xff]
    %v67 = vld [vmem:[%s3 + $0x18] sm:$0xff]
    %vm68 = vcmask 261120
    %v70 = vsel %vm68, %v48, 0
    %v73 = vsel %vm68, %v49, 0
    %v76 = vsel %vm68, %v50, 0
    %v79 = vsel %vm68, %v51, 0
    %v82 = vsel %vm68, %v52, 0
    %v85 = vsel %vm68, %v53, 0
    %v88 = vsel %vm68, %v54, 0
    %v91 = vsel %vm68, %v55, 0
    %v94 = vsel %vm68, %v56, 0
    %v97 = vsel %vm68, %v57, 0
    %v100 = vsel %vm68, %v58, 0
    %v103 = vsel %vm68, %v59, 0
    %v106 = vsel %vm68, %v60, 0
    %v109 = vsel %vm68, %v61, 0
    %v112 = vsel %vm68, %v62, 0
    %v115 = vsel %vm68, %v63, 0
    %117 = vmatprep.subr.mxu0 0.0
    %118 = vmatpush1.msra.mxu0 0.0
    %119 = vmatprep.subr.mxu0 0.0
    %120 = vmatpush1.msra.mxu0 0.0
    %121 = vmatprep.subr.mxu0 0.0
    %122 = vmatpush1.msra.mxu0 0.0
    %123 = vmatprep.subr.mxu0 0.0
    %124 = vmatpush1.msra.mxu0 0.0
    %125 = vmatprep.subr.mxu0 0.0
    %126 = vmatpush1.msra.mxu0 0.0
    %127 = vmatprep.subr.mxu0 0.0
    %128 = vmatpush1.msra.mxu0 0.0
    %129 = vmatprep.subr.mxu0 0.0
    %130 = vmatpush1.msra.mxu0 0.0
    %131 = vmatprep.subr.mxu0 0.0
    %132 = vmatpush1.msra.mxu0 0.0
    %133 = vmatprep.subr.mxu0 0.0
    %134 = vmatpush1.msra.mxu0 0.0
    %135 = vmatprep.subr.mxu0 0.0
    %136 = vmatpush1.msra.mxu0 0.0
    %137 = vmatprep.subr.mxu0 0.0
    %138 = vmatpush1.msra.mxu0 0.0
    %139 = vmatprep.subr.mxu0 0.0
    %140 = vmatpush1.msra.mxu0 0.0
    %141 = vmatprep.subr.mxu0 0.0
    %142 = vmatpush1.msra.mxu0 %v67
    %143 = vmatprep.subr.mxu0 0.0
    %144 = vmatpush1.msra.mxu0 %v66
    %145 = vmatprep.subr.mxu0 0.0
    %146 = vmatpush1.msra.mxu0 %v65
    %147 = vmatprep.subr.mxu0 0.0
    %148 = vmatpush1.msra.mxu0 %v64
    %149 = vmatprep.subr.mxu0 0.0
    %150 = vmatpush2.msra.mxu0 0.0
    %151 = vmatprep.subr.mxu0 0.0
    %152 = vmatpush2.msra.mxu0 0.0
    %153 = vmatprep.subr.mxu0 0.0
    %154 = vmatpush2.msra.mxu0 0.0
    %155 = vmatprep.subr.mxu0 0.0
    %156 = vmatpush2.msra.mxu0 0.0
    %157 = vmatprep.subr.mxu0 0.0
    %158 = vmatpush2.msra.mxu0 0.0
    %159 = vmatprep.subr.mxu0 0.0
    %160 = vmatpush2.msra.mxu0 0.0
    %161 = vmatprep.subr.mxu0 0.0
    %162 = vmatpush2.msra.mxu0 0.0
    %163 = vmatprep.subr.mxu0 0.0
    %164 = vmatpush2.msra.mxu0 0.0
    %165 = vmatprep.subr.mxu0 0.0
    %166 = vmatpush2.msra.mxu0 0.0
    %167 = vmatprep.subr.mxu0 0.0
    %168 = vmatpush2.msra.mxu0 0.0
    %169 = vmatprep.subr.mxu0 0.0
    %170 = vmatpush2.msra.mxu0 0.0
    %171 = vmatprep.subr.mxu0 0.0
    %172 = vmatpush2.msra.mxu0 0.0
    %173 = vmatprep.subr.mxu0 0.0
    %174 = vmatpush2.msra.mxu0 0.0
    %175 = vmatprep.subr.mxu0 0.0
    %176 = vmatpush2.msra.mxu0 0.0
    %177 = vmatprep.subr.mxu0 0.0
    %178 = vmatpush2.msra.mxu0 0.0
    %179 = vmatprep.subr.mxu0 0.0
    %180 = vmatpush2.msra.mxu0 0.0
    %181 = vmatprep.mubr.f32.mxu0 0.0
    %182 = vmatmul.mubr.f32.gmra.mxu0 %v70
    %v183 = vpop.f32.mrf.mxu0
    %v184 = vadd.f32 0.0, %v183
    %v185 = vpop.f32.mrf.mxu0
    %186 = vmatprep.mubr.f32.mxu0 0.0
    %187 = vmatmul.mubr.f32.gmra.mxu0 %v73
    %v188 = vpop.f32.mrf.mxu0
    %v189 = vadd.f32 0.0, %v188
    %v190 = vpop.f32.mrf.mxu0
    %191 = vmatprep.mubr.f32.mxu0 0.0
    %192 = vmatmul.mubr.f32.gmra.mxu0 %v76
    %v193 = vpop.f32.mrf.mxu0
    %v194 = vadd.f32 0.0, %v193
    %v195 = vpop.f32.mrf.mxu0
    %196 = vmatprep.mubr.f32.mxu0 0.0
    %197 = vmatmul.mubr.f32.gmra.mxu0 %v79
    %v198 = vpop.f32.mrf.mxu0
    %v199 = vadd.f32 0.0, %v198
    %v200 = vpop.f32.mrf.mxu0
    %201 = vmatprep.mubr.f32.mxu0 0.0
    %202 = vmatmul.mubr.f32.gmra.mxu0 %v82
    %v203 = vpop.f32.mrf.mxu0
    %v204 = vadd.f32 0.0, %v203
    %v205 = vpop.f32.mrf.mxu0
    %206 = vmatprep.mubr.f32.mxu0 0.0
    %207 = vmatmul.mubr.f32.gmra.mxu0 %v85
    %v208 = vpop.f32.mrf.mxu0
    %v209 = vadd.f32 0.0, %v208
    %v210 = vpop.f32.mrf.mxu0
    %211 = vmatprep.mubr.f32.mxu0 0.0
    %212 = vmatmul.mubr.f32.gmra.mxu0 %v88
    %v213 = vpop.f32.mrf.mxu0
    %v214 = vadd.f32 0.0, %v213
    %v215 = vpop.f32.mrf.mxu0
    %216 = vmatprep.mubr.f32.mxu0 0.0
    %217 = vmatmul.mubr.f32.gmra.mxu0 %v91
    %v218 = vpop.f32.mrf.mxu0
    %v219 = vadd.f32 0.0, %v218
    %v220 = vpop.f32.mrf.mxu0
    %221 = vmatprep.mubr.f32.mxu0 0.0
    %222 = vmatmul.mubr.f32.gmra.mxu0 %v94
    %v223 = vpop.f32.mrf.mxu0
    %v224 = vadd.f32 0.0, %v223
    %v225 = vpop.f32.mrf.mxu0
    %226 = vmatprep.mubr.f32.mxu0 0.0
    %227 = vmatmul.mubr.f32.gmra.mxu0 %v97
    %v228 = vpop.f32.mrf.mxu0
    %v229 = vadd.f32 0.0, %v228
    %v230 = vpop.f32.mrf.mxu0
    %231 = vmatprep.mubr.f32.mxu0 0.0
    %232 = vmatmul.mubr.f32.gmra.mxu0 %v100
    %v233 = vpop.f32.mrf.mxu0
    %v234 = vadd.f32 0.0, %v233
    %v235 = vpop.f32.mrf.mxu0
    %236 = vmatprep.mubr.f32.mxu0 0.0
    %237 = vmatmul.mubr.f32.gmra.mxu0 %v103
    %v238 = vpop.f32.mrf.mxu0
    %v239 = vadd.f32 0.0, %v238
    %v240 = vpop.f32.mrf.mxu0
    %241 = vmatprep.mubr.f32.mxu0 0.0
    %242 = vmatmul.mubr.f32.gmra.mxu0 %v106
    %v243 = vpop.f32.mrf.mxu0
    %v244 = vadd.f32 0.0, %v243
    %v245 = vpop.f32.mrf.mxu0
    %246 = vmatprep.mubr.f32.mxu0 0.0
    %247 = vmatmul.mubr.f32.gmra.mxu0 %v109
    %v248 = vpop.f32.mrf.mxu0
    %v249 = vadd.f32 0.0, %v248
    %v250 = vpop.f32.mrf.mxu0
    %251 = vmatprep.mubr.f32.mxu0 0.0
    %252 = vmatmul.mubr.f32.gmra.mxu0 %v112
    %v253 = vpop.f32.mrf.mxu0
    %v254 = vadd.f32 0.0, %v253
    %v255 = vpop.f32.mrf.mxu0
    %256 = vmatprep.mubr.f32.mxu0 0.0
    %257 = vmatmul.mubr.f32.gmra.mxu0 %v115
    %v258 = vpop.f32.mrf.mxu0
    %v259 = vadd.f32 0.0, %v258
    %v260 = vpop.f32.mrf.mxu0
    %261 = vdwg.mxu0
    %v263 = vsel %vm68, %v28, 0
    %v266 = vsel %vm68, %v29, 0
    %v269 = vsel %vm68, %v30, 0
    %v272 = vsel %vm68, %v31, 0
    %v275 = vsel %vm68, %v32, 0
    %v278 = vsel %vm68, %v33, 0
    %v281 = vsel %vm68, %v34, 0
    %v284 = vsel %vm68, %v35, 0
    %v287 = vsel %vm68, %v36, 0
    %v290 = vsel %vm68, %v37, 0
    %v293 = vsel %vm68, %v38, 0
    %v296 = vsel %vm68, %v39, 0
    %v299 = vsel %vm68, %v40, 0
    %v302 = vsel %vm68, %v41, 0
    %v305 = vsel %vm68, %v42, 0
    %v308 = vsel %vm68, %v43, 0
    %310 = vmatprep.subr.mxu0 0.0
    %311 = vmatpush1.msra.mxu0 0.0
    %312 = vmatprep.subr.mxu0 0.0
    %313 = vmatpush1.msra.mxu0 0.0
    %314 = vmatprep.subr.mxu0 0.0
    %315 = vmatpush1.msra.mxu0 0.0
    %316 = vmatprep.subr.mxu0 0.0
    %317 = vmatpush1.msra.mxu0 0.0
    %318 = vmatprep.subr.mxu0 0.0
    %319 = vmatpush1.msra.mxu0 0.0
    %320 = vmatprep.subr.mxu0 0.0
    %321 = vmatpush1.msra.mxu0 0.0
    %322 = vmatprep.subr.mxu0 0.0
    %323 = vmatpush1.msra.mxu0 0.0
    %324 = vmatprep.subr.mxu0 0.0
    %325 = vmatpush1.msra.mxu0 0.0
    %326 = vmatprep.subr.mxu0 0.0
    %327 = vmatpush1.msra.mxu0 0.0
    %328 = vmatprep.subr.mxu0 0.0
    %329 = vmatpush1.msra.mxu0 0.0
    %330 = vmatprep.subr.mxu0 0.0
    %331 = vmatpush1.msra.mxu0 0.0
    %332 = vmatprep.subr.mxu0 0.0
    %333 = vmatpush1.msra.mxu0 0.0
    %334 = vmatprep.subr.mxu0 0.0
    %335 = vmatpush1.msra.mxu0 %v47
    %336 = vmatprep.subr.mxu0 0.0
    %337 = vmatpush1.msra.mxu0 %v46
    %338 = vmatprep.subr.mxu0 0.0
    %339 = vmatpush1.msra.mxu0 %v45
    %340 = vmatprep.subr.mxu0 0.0
    %341 = vmatpush1.msra.mxu0 %v44
    %342 = vmatprep.subr.mxu0 0.0
    %343 = vmatpush2.msra.mxu0 0.0
    %344 = vmatprep.subr.mxu0 0.0
    %345 = vmatpush2.msra.mxu0 0.0
    %346 = vmatprep.subr.mxu0 0.0
    %347 = vmatpush2.msra.mxu0 0.0
    %348 = vmatprep.subr.mxu0 0.0
    %349 = vmatpush2.msra.mxu0 0.0
    %350 = vmatprep.subr.mxu0 0.0
    %351 = vmatpush2.msra.mxu0 0.0
    %352 = vmatprep.subr.mxu0 0.0
    %353 = vmatpush2.msra.mxu0 0.0
    %354 = vmatprep.subr.mxu0 0.0
    %355 = vmatpush2.msra.mxu0 0.0
    %356 = vmatprep.subr.mxu0 0.0
    %357 = vmatpush2.msra.mxu0 0.0
    %358 = vmatprep.subr.mxu0 0.0
    %359 = vmatpush2.msra.mxu0 0.0
    %360 = vmatprep.subr.mxu0 0.0
    %361 = vmatpush2.msra.mxu0 0.0
    %362 = vmatprep.subr.mxu0 0.0
    %363 = vmatpush2.msra.mxu0 0.0
    %364 = vmatprep.subr.mxu0 0.0
    %365 = vmatpush2.msra.mxu0 0.0
    %366 = vmatprep.subr.mxu0 0.0
    %367 = vmatpush2.msra.mxu0 0.0
    %368 = vmatprep.subr.mxu0 0.0
    %369 = vmatpush2.msra.mxu0 0.0
    %370 = vmatprep.subr.mxu0 0.0
    %371 = vmatpush2.msra.mxu0 0.0
    %372 = vmatprep.subr.mxu0 0.0
    %373 = vmatpush2.msra.mxu0 0.0
    %374 = vmatprep.mubr.f32.mxu0 0.0
    %375 = vmatmul.mubr.f32.gmra.mxu0 %v263
    %v376 = vpop.f32.mrf.mxu0
    %v377 = vadd.f32 %v184, %v376
    %v378 = vpop.f32.mrf.mxu0
    %379 = vmatprep.mubr.f32.mxu0 0.0
    %380 = vmatmul.mubr.f32.gmra.mxu0 %v266
    %v381 = vpop.f32.mrf.mxu0
    %v382 = vadd.f32 %v189, %v381
    %v383 = vpop.f32.mrf.mxu0
    %384 = vmatprep.mubr.f32.mxu0 0.0
    %385 = vmatmul.mubr.f32.gmra.mxu0 %v269
    %v386 = vpop.f32.mrf.mxu0
    %v387 = vadd.f32 %v194, %v386
    %v388 = vpop.f32.mrf.mxu0
    %389 = vmatprep.mubr.f32.mxu0 0.0
    %390 = vmatmul.mubr.f32.gmra.mxu0 %v272
    %v391 = vpop.f32.mrf.mxu0
    %v392 = vadd.f32 %v199, %v391
    %v393 = vpop.f32.mrf.mxu0
    %394 = vmatprep.mubr.f32.mxu0 0.0
    %395 = vmatmul.mubr.f32.gmra.mxu0 %v275
    %v396 = vpop.f32.mrf.mxu0
    %v397 = vadd.f32 %v204, %v396
    %v398 = vpop.f32.mrf.mxu0
    %399 = vmatprep.mubr.f32.mxu0 0.0
    %400 = vmatmul.mubr.f32.gmra.mxu0 %v278
    %v401 = vpop.f32.mrf.mxu0
    %v402 = vadd.f32 %v209, %v401
    %v403 = vpop.f32.mrf.mxu0
    %404 = vmatprep.mubr.f32.mxu0 0.0
    %405 = vmatmul.mubr.f32.gmra.mxu0 %v281
    %v406 = vpop.f32.mrf.mxu0
    %v407 = vadd.f32 %v214, %v406
    %v408 = vpop.f32.mrf.mxu0
    %409 = vmatprep.mubr.f32.mxu0 0.0
    %410 = vmatmul.mubr.f32.gmra.mxu0 %v284
    %v411 = vpop.f32.mrf.mxu0
    %v412 = vadd.f32 %v219, %v411
    %v413 = vpop.f32.mrf.mxu0
    %414 = vmatprep.mubr.f32.mxu0 0.0
    %415 = vmatmul.mubr.f32.gmra.mxu0 %v287
    %v416 = vpop.f32.mrf.mxu0
    %v417 = vadd.f32 %v224, %v416
    %v418 = vpop.f32.mrf.mxu0
    %419 = vmatprep.mubr.f32.mxu0 0.0
    %420 = vmatmul.mubr.f32.gmra.mxu0 %v290
    %v421 = vpop.f32.mrf.mxu0
    %v422 = vadd.f32 %v229, %v421
    %v423 = vpop.f32.mrf.mxu0
    %424 = vmatprep.mubr.f32.mxu0 0.0
    %425 = vmatmul.mubr.f32.gmra.mxu0 %v293
    %v426 = vpop.f32.mrf.mxu0
    %v427 = vadd.f32 %v234, %v426
    %v428 = vpop.f32.mrf.mxu0
    %429 = vmatprep.mubr.f32.mxu0 0.0
    %430 = vmatmul.mubr.f32.gmra.mxu0 %v296
    %v431 = vpop.f32.mrf.mxu0
    %v432 = vadd.f32 %v239, %v431
    %v433 = vpop.f32.mrf.mxu0
    %434 = vmatprep.mubr.f32.mxu0 0.0
    %435 = vmatmul.mubr.f32.gmra.mxu0 %v299
    %v436 = vpop.f32.mrf.mxu0
    %v437 = vadd.f32 %v244, %v436
    %v438 = vpop.f32.mrf.mxu0
    %439 = vmatprep.mubr.f32.mxu0 0.0
    %440 = vmatmul.mubr.f32.gmra.mxu0 %v302
    %v441 = vpop.f32.mrf.mxu0
    %v442 = vadd.f32 %v249, %v441
    %v443 = vpop.f32.mrf.mxu0
    %444 = vmatprep.mubr.f32.mxu0 0.0
    %445 = vmatmul.mubr.f32.gmra.mxu0 %v305
    %v446 = vpop.f32.mrf.mxu0
    %v447 = vadd.f32 %v254, %v446
    %v448 = vpop.f32.mrf.mxu0
    %449 = vmatprep.mubr.f32.mxu0 0.0
    %450 = vmatmul.mubr.f32.gmra.mxu0 %v308
    %v451 = vpop.f32.mrf.mxu0
    %v452 = vadd.f32 %v259, %v451
    %v453 = vpop.f32.mrf.mxu0
    %454 = vdwg.mxu0
    %v455 = vld [vmem:[%s4] sm:$0x1]
    %v457 = vlaneseq
    %v458 = vshrl.u32 %v457, 7
    %v459 = vsub.s32 0, %v458
    %v460 = vrot.slane %v455, %v459
    %v462 = vadd.f32 %v377, %v460
    %v463 = vadd.f32 %v382, %v460
    %v464 = vadd.f32 %v387, %v460
    %v465 = vadd.f32 %v392, %v460
    %v466 = vadd.f32 %v397, %v460
    %v467 = vadd.f32 %v402, %v460
    %v468 = vadd.f32 %v407, %v460
    %v469 = vadd.f32 %v412, %v460
    %v470 = vadd.f32 %v417, %v460
    %v471 = vadd.f32 %v422, %v460
    %v472 = vadd.f32 %v427, %v460
    %v473 = vadd.f32 %v432, %v460
    %v474 = vadd.f32 %v437, %v460
    %v475 = vadd.f32 %v442, %v460
    %v476 = vadd.f32 %v447, %v460
    %v477 = vadd.f32 %v452, %v460
    %v478 = vmax.f32 %v462, 0.0
    %v479 = vmax.f32 %v463, 0.0
    %v480 = vmax.f32 %v464, 0.0
    %v481 = vmax.f32 %v465, 0.0
    %v482 = vmax.f32 %v466, 0.0
    %v483 = vmax.f32 %v467, 0.0
    %v484 = vmax.f32 %v468, 0.0
    %v485 = vmax.f32 %v469, 0.0
    %v486 = vmax.f32 %v470, 0.0
    %v487 = vmax.f32 %v471, 0.0
    %v488 = vmax.f32 %v472, 0.0
    %v489 = vmax.f32 %v473, 0.0
    %v490 = vmax.f32 %v474, 0.0
    %v491 = vmax.f32 %v475, 0.0
    %v492 = vmax.f32 %v476, 0.0
    %v493 = vmax.f32 %v477, 0.0
    %v494 = vld [vmem:[%s5] sm:$0x1]
    %v496 = vlaneseq
    %v497 = vshrl.u32 %v496, 7
    %v498 = vsub.s32 0, %v497
    %v499 = vrot.slane %v494, %v498
    %v501 = vmul.f32 %v478, %v499
    %v502 = vmul.f32 %v479, %v499
    %v503 = vmul.f32 %v480, %v499
    %v504 = vmul.f32 %v481, %v499
    %v505 = vmul.f32 %v482, %v499
    %v506 = vmul.f32 %v483, %v499
    %v507 = vmul.f32 %v484, %v499
    %v508 = vmul.f32 %v485, %v499
    %v509 = vmul.f32 %v486, %v499
    %v510 = vmul.f32 %v487, %v499
    %v511 = vmul.f32 %v488, %v499
    %v512 = vmul.f32 %v489, %v499
    %v513 = vmul.f32 %v490, %v499
    %v514 = vmul.f32 %v491, %v499
    %v515 = vmul.f32 %v492, %v499
    %v516 = vmul.f32 %v493, %v499
    %v517 = vsel %vm68, %v501, 0.0
    %518 = vadd.xlane.f32.xlu0 %v517
    %v519 = vpop.xlane.xlu0 %518
    %v520 = vsel %vm68, %v502, 0.0
    %521 = vadd.xlane.f32.xlu0 %v520
    %v522 = vpop.xlane.xlu0 %521
    %v523 = vsel %vm68, %v503, 0.0
    %524 = vadd.xlane.f32.xlu0 %v523
    %v525 = vpop.xlane.xlu0 %524
    %v526 = vsel %vm68, %v504, 0.0
    %527 = vadd.xlane.f32.xlu0 %v526
    %v528 = vpop.xlane.xlu0 %527
    %v529 = vsel %vm68, %v505, 0.0
    %530 = vadd.xlane.f32.xlu0 %v529
    %v531 = vpop.xlane.xlu0 %530
    %v532 = vsel %vm68, %v506, 0.0
    %533 = vadd.xlane.f32.xlu0 %v532
    %v534 = vpop.xlane.xlu0 %533
    %v535 = vsel %vm68, %v507, 0.0
    %536 = vadd.xlane.f32.xlu0 %v535
    %v537 = vpop.xlane.xlu0 %536
    %v538 = vsel %vm68, %v508, 0.0
    %539 = vadd.xlane.f32.xlu0 %v538
    %v540 = vpop.xlane.xlu0 %539
    %v541 = vsel %vm68, %v509, 0.0
    %542 = vadd.xlane.f32.xlu0 %v541
    %v543 = vpop.xlane.xlu0 %542
    %v544 = vsel %vm68, %v510, 0.0
    %545 = vadd.xlane.f32.xlu0 %v544
    %v546 = vpop.xlane.xlu0 %545
    %v547 = vsel %vm68, %v511, 0.0
    %548 = vadd.xlane.f32.xlu0 %v547
    %v549 = vpop.xlane.xlu0 %548
    %v550 = vsel %vm68, %v512, 0.0
    %551 = vadd.xlane.f32.xlu0 %v550
    %v552 = vpop.xlane.xlu0 %551
    %v553 = vsel %vm68, %v513, 0.0
    %554 = vadd.xlane.f32.xlu0 %v553
    %v555 = vpop.xlane.xlu0 %554
    %v556 = vsel %vm68, %v514, 0.0
    %557 = vadd.xlane.f32.xlu0 %v556
    %v558 = vpop.xlane.xlu0 %557
    %v559 = vsel %vm68, %v515, 0.0
    %560 = vadd.xlane.f32.xlu0 %v559
    %v561 = vpop.xlane.xlu0 %560
    %v562 = vsel %vm68, %v516, 0.0
    %563 = vadd.xlane.f32.xlu0 %v562
    %v564 = vpop.xlane.xlu0 %563
    %s565 = sld [smem:[#allocation2]]
    %v566 = vstv %s565
    %v567 = vadd.f32 %v519, %v566
    %v568 = vadd.f32 %v522, %v566
    %v569 = vadd.f32 %v525, %v566
    %v570 = vadd.f32 %v528, %v566
    %v571 = vadd.f32 %v531, %v566
    %v572 = vadd.f32 %v534, %v566
    %v573 = vadd.f32 %v537, %v566
    %v574 = vadd.f32 %v540, %v566
    %v575 = vadd.f32 %v543, %v566
    %v576 = vadd.f32 %v546, %v566
    %v577 = vadd.f32 %v549, %v566
    %v578 = vadd.f32 %v552, %v566
    %v579 = vadd.f32 %v555, %v566
    %v580 = vadd.f32 %v558, %v566
    %v581 = vadd.f32 %v561, %v566
    %v582 = vadd.f32 %v564, %v566
    %v599 = vlaneseq
    %v600 = vand.u32 %v599, 127
    %v601 = vlaneseq
    %v602 = vshrl.u32 %v601, 7
    %v603 = vsub.s32 %v600, %v602
    %v604 = vrot.slane %v567, %v603
    %v605 = vadd.s32 %v600, 4294967288
    %v606 = vlaneseq
    %v607 = vshrl.u32 %v606, 7
    %v608 = vsub.s32 %v605, %v607
    %v609 = vrot.slane %v568, %v608
    %vm610 = vcmask 130112
    %v611 = vsel %vm610, %v609, %v604
    %v612 = vadd.s32 %v600, 4294967280
    %v613 = vlaneseq
    %v614 = vshrl.u32 %v613, 7
    %v615 = vsub.s32 %v612, %v614
    %v616 = vrot.slane %v569, %v615
    %vm617 = vcmask 195712
    %v618 = vsel %vm617, %v616, %v611
    %v619 = vadd.s32 %v600, 4294967272
    %v620 = vlaneseq
    %v621 = vshrl.u32 %v620, 7
    %v622 = vsub.s32 %v619, %v621
    %v623 = vrot.slane %v570, %v622
    %vm624 = vcmask 261312
    %v625 = vsel %vm624, %v623, %v618
    %v626 = vadd.s32 %v600, 4294967264
    %v627 = vlaneseq
    %v628 = vshrl.u32 %v627, 7
    %v629 = vsub.s32 %v626, %v628
    %v630 = vrot.slane %v571, %v629
    %vm631 = vcmask 326912
    %v632 = vsel %vm631, %v630, %v625
    %v633 = vadd.s32 %v600, 4294967256
    %v634 = vlaneseq
    %v635 = vshrl.u32 %v634, 7
    %v636 = vsub.s32 %v633, %v635
    %v637 = vrot.slane %v572, %v636
    %vm638 = vcmask 392512
    %v639 = vsel %vm638, %v637, %v632
    %v640 = vadd.s32 %v600, 4294967248
    %v641 = vlaneseq
    %v642 = vshrl.u32 %v641, 7
    %v643 = vsub.s32 %v640, %v642
    %v644 = vrot.slane %v573, %v643
    %vm645 = vcmask 458112
    %v646 = vsel %vm645, %v644, %v639
    %v647 = vadd.s32 %v600, 4294967240
    %v648 = vlaneseq
    %v649 = vshrl.u32 %v648, 7
    %v650 = vsub.s32 %v647, %v649
    %v651 = vrot.slane %v574, %v650
    %vm652 = vcmask 523712
    %v653 = vsel %vm652, %v651, %v646
    %v654 = vadd.s32 %v600, 4294967232
    %v655 = vlaneseq
    %v656 = vshrl.u32 %v655, 7
    %v657 = vsub.s32 %v654, %v656
    %v658 = vrot.slane %v575, %v657
    %vm659 = vcmask 589312
    %v660 = vsel %vm659, %v658, %v653
    %v661 = vadd.s32 %v600, 4294967224
    %v662 = vlaneseq
    %v663 = vshrl.u32 %v662, 7
    %v664 = vsub.s32 %v661, %v663
    %v665 = vrot.slane %v576, %v664
    %vm666 = vcmask 654912
    %v667 = vsel %vm666, %v665, %v660
    %v668 = vadd.s32 %v600, 4294967216
    %v669 = vlaneseq
    %v670 = vshrl.u32 %v669, 7
    %v671 = vsub.s32 %v668, %v670
    %v672 = vrot.slane %v577, %v671
    %vm673 = vcmask 720512
    %v674 = vsel %vm673, %v672, %v667
    %v675 = vadd.s32 %v600, 4294967208
    %v676 = vlaneseq
    %v677 = vshrl.u32 %v676, 7
    %v678 = vsub.s32 %v675, %v677
    %v679 = vrot.slane %v578, %v678
    %vm680 = vcmask 786112
    %v681 = vsel %vm680, %v679, %v674
    %v682 = vadd.s32 %v600, 4294967200
    %v683 = vlaneseq
    %v684 = vshrl.u32 %v683, 7
    %v685 = vsub.s32 %v682, %v684
    %v686 = vrot.slane %v579, %v685
    %vm687 = vcmask 851712
    %v688 = vsel %vm687, %v686, %v681
    %v689 = vadd.s32 %v600, 4294967192
    %v690 = vlaneseq
    %v691 = vshrl.u32 %v690, 7
    %v692 = vsub.s32 %v689, %v691
    %v693 = vrot.slane %v580, %v692
    %vm694 = vcmask 917312
    %v695 = vsel %vm694, %v693, %v688
    %v696 = vadd.s32 %v600, 4294967184
    %v697 = vlaneseq
    %v698 = vshrl.u32 %v697, 7
    %v699 = vsub.s32 %v696, %v698
    %v700 = vrot.slane %v581, %v699
    %vm701 = vcmask 982912
    %v702 = vsel %vm701, %v700, %v695
    %v703 = vadd.s32 %v600, 4294967176
    %v704 = vlaneseq
    %v705 = vshrl.u32 %v704, 7
    %v706 = vsub.s32 %v703, %v705
    %v707 = vrot.slane %v582, %v706
    %vm708 = vcmask 1048512
    %v709 = vsel %vm708, %v707, %v702
    %711 = vst [vmem:[#allocation3] sm:$0x1] %v709
    // Predicated region
    $region30: #{tpu_custom_call.1} parent=1 // pred_check
      _
    $region31: #{tpu_custom_call.1} parent=1 // pred_check_branch
      %713 = sbr.rel (0) target = $region33
    $region32: #{tpu_custom_call.1} parent=1 // pred_region
      %s715 = ssub.s32 16, 16
      %716 = vsyncadd [#allocation4], %s715
      %s718 = sshll.u32 [#allocation3], 4
      %s719 = int_to_ptr.vmem [resolvable:$true] %s718
      %721 = dma.vmem_to_hbm [thread:$0]  %s719, 16, %s7, [#allocation4]
    $region33: #{tpu_custom_call.1} parent=1 // pred_fallthru
      _
    // Predicated region
    $region34: #{tpu_custom_call.1} parent=1 // pred_check
      _
    $region35: #{tpu_custom_call.1} parent=1 // pred_check_branch
      %723 = sbr.rel (0) target = $region37
    $region36: #{tpu_custom_call.1} parent=1 // pred_region
      %724 = dma.done [#allocation4], 16
    $region37: #{tpu_custom_call.1} parent=1 // pred_fallthru
      _
    %725 = vsyncpa [#allocation4], 1

</llo_original>
